<compile_context>
chip_gen: v7x
topology: tpu7x:2x2x1
jax: 0.10.0
libtpu: 0.0.40
codegen_flags: <defaults>
</compile_context>

<pallas_src>
import jax
import jax.numpy as jnp
from jax.experimental import pallas as pl
from jax.experimental.pallas import tpu as pltpu


def _round_up(x, m):
    return ((x + m - 1) // m) * m


def _cdiv(a, b):
    return -(-a // b)


def _vmem_capacity_bytes():
    """Physical VMEM of the local chip; conservative 64 MiB (v7x) fallback."""
    try:
        info = pltpu.get_tpu_info()
        for name in ("vmem_capacity_bytes", "vmem_size_bytes", "vmem_bytes"):
            v = getattr(info, name, None)
            if v:
                return int(v)
    except Exception:
        pass
    return 64 * 1024 * 1024


def _choose_tb(batch, s_pad, d, c_total, vh, in_itemsize, masked, cap):
    """Sequences per grid step.

    Targets ~8k projection rows per step (review: 4k-16k rows / 2-8 MiB tile),
    shrinks to fit a lane-padding-aware VMEM estimate under ~70% of physical
    VMEM, and keeps >= 2 grid steps for non-trivial batches (v7x megacore).
    """
    budget = int(cap * 0.70)
    lanes_d = _round_up(d, 128)
    lanes_c = _round_up(c_total, 128)
    lanes_v = _round_up(vh, 128)
    s_tiles = s_pad // 8

    def est(tb):
        rows = tb * s_pad
        seq_blk = 2 * rows * lanes_d * in_itemsize                 # double-buffered input
        mask_blk = (2 * tb * s_tiles * 8 * 128 * 4) if masked else 0
        out_blk = 2 * tb * lanes_v * 4
        # peak live f32 intermediates: x, proj, key/kq, value, plus the
        # (TB, S, 1)-layout logits/exp temporaries (one 128-lane tile per group)
        inter = rows * (lanes_d + lanes_c + 2 * 128 + lanes_v) * 4
        inter += 3 * tb * s_tiles * 8 * 128 * 4
        weights = 2 * (_round_up(d, 8) * lanes_c + 8 * lanes_c + 8 * 128) * 4
        return seq_blk + mask_blk + out_blk + inter + weights

    if batch <= 8:
        return batch

    tb = max(8, _round_up(_cdiv(8192, s_pad), 8))     # ~8k matmul rows per step
    while tb > 8 and est(tb) > budget:
        tb -= 8
    tb = min(tb, _round_up(batch, 8))
    if batch >= 16 and tb >= batch:
        # v7x has 2 TensorCores sharded along the "parallel" grid axis.
        tb = max(8, _round_up(_cdiv(batch, 2), 8))
    return tb


def _make_kernel(masked: bool, has_value_proj: bool, qp: int, vh: int):
    """Fused kernel body. mask=None / wv=None paths are specialized at trace time."""

    def kernel(*refs):
        if masked:
            seq_ref, mask_ref, w_ref, b_ref, q_ref, out_ref = refs
        else:
            seq_ref, w_ref, b_ref, q_ref, out_ref = refs
            mask_ref = None

        tb, s, d = seq_ref.shape
        rows = tb * s

        # Tall fused key/value projection on the MXU (s % 8 == 0 -> free reshape).
        x = seq_ref[...].reshape(rows, d).astype(jnp.float32)          # (R, D)
        proj = (jnp.dot(x, w_ref[...], preferred_element_type=jnp.float32)
                + b_ref[...])                                          # (R, QP[+Vh])

        key = jnp.tanh(proj[:, :qp])                                   # (R, QP)
        if has_value_proj:
            value = proj[:, qp:qp + vh].reshape(tb, s, vh)             # aligned slice
        else:
            value = x.reshape(tb, s, vh)                               # value == input

        # Attention logits on the VPU/XLU (mul + lane reduce); padded q columns
        # are zero so they do not contribute.
        logits = jnp.sum(key * q_ref[...], axis=-1,
                         keepdims=True).reshape(tb, s, 1)              # (TB, S, 1)

        if masked:
            maskf = mask_ref[...]                                      # (TB, S, 1) in {0,1}
            logits = jnp.where(maskf > 0.5, logits, -1e30)

        # Numerically-stable softmax over the sequence axis; the normalization
        # is folded into the final divide (flash-attention style).
        m = jnp.max(logits, axis=1, keepdims=True)                     # (TB, 1, 1)
        e = jnp.exp(logits - m)                                        # (TB, S, 1)
        if masked:
            # TODO(synk): assumes easytext's masked_softmax zeroes masked
            # positions and renormalizes with a +1e-13 denominator (so fully
            # masked rows pool to zeros).
            e = e * maskf

        denom = jnp.sum(e, axis=1, keepdims=True)                      # (TB, 1, 1)
        if masked:
            denom = denom + 1e-13
        # Weighted sum over S on the VPU/XLU (no batched M=1 MXU matmuls).
        numer = jnp.sum(value * e, axis=1, keepdims=True)              # (TB, 1, Vh)
        out_ref[...] = (numer / denom).reshape(tb, vh).astype(out_ref.dtype)

    return kernel


def attention_seq2vec(sequence, mask, wk, bk, q, wv=None, bv=None):
    """sequence: (B, S, D); mask: (B, S) or None; returns (B, Vh or D) float32."""
    B, S, D = sequence.shape
    Qh = wk.shape[1]
    QP = _round_up(Qh, 128)                    # lane-align the key/value split
    f32 = jnp.float32

    wk_p = jnp.zeros((D, QP), f32).at[:, :Qh].set(wk.astype(f32))
    bk_p = jnp.zeros((1, QP), f32).at[:, :Qh].set(jnp.reshape(bk, (1, Qh)).astype(f32))
    q_p = jnp.zeros((1, QP), f32).at[:, :Qh].set(jnp.reshape(q, (1, Qh)).astype(f32))

    has_value_proj = wv is not None
    if has_value_proj:
        Vh = wv.shape[1]
        w = jnp.concatenate([wk_p, wv.astype(f32)], axis=1)            # (D, QP+Vh)
        b = jnp.concatenate([bk_p, jnp.reshape(bv, (1, Vh)).astype(f32)], axis=1)
    else:
        Vh = D                                                         # value = input
        w, b = wk_p, bk_p
    C = w.shape[1]

    # Pad S only when required so in-kernel reshapes stay layout no-ops; pad
    # positions are masked out (all-ones mask over real positions == softmax).
    S_pad = _round_up(S, 8)
    masked = (mask is not None) or (S_pad != S)
    if S_pad != S:
        sequence = jnp.pad(sequence, ((0, 0), (0, S_pad - S), (0, 0)))
    maskf = None
    if masked:
        base = (jnp.ones((B, S), f32) if mask is None
                else jnp.reshape(mask, (B, S)).astype(f32))
        if S_pad != S:
            base = jnp.pad(base, ((0, 0), (0, S_pad - S)))
        maskf = base.reshape(B, S_pad, 1)

    cap = _vmem_capacity_bytes()
    TB = _choose_tb(B, S_pad, D, C, Vh,
                    jnp.dtype(sequence.dtype).itemsize, masked, cap)
    grid = (pl.cdiv(B, TB),)                   # partial last block handled by Pallas

    in_specs = [pl.BlockSpec((TB, S_pad, D), lambda i: (i, 0, 0))]     # sequence
    args = [sequence]
    if masked:
        in_specs.append(pl.BlockSpec((TB, S_pad, 1), lambda i: (i, 0, 0)))
        args.append(maskf)
    in_specs += [
        pl.BlockSpec((D, C), lambda i: (0, 0)),                        # fused W (resident)
        pl.BlockSpec((1, C), lambda i: (0, 0)),                        # fused bias
        pl.BlockSpec((1, QP), lambda i: (0, 0)),                       # padded query
    ]
    args += [w, b, q_p]

    out = pl.pallas_call(
        _make_kernel(masked, has_value_proj, QP, Vh),
        out_shape=jax.ShapeDtypeStruct((B, Vh), jnp.float32),
        grid=grid,
        in_specs=in_specs,
        out_specs=pl.BlockSpec((TB, Vh), lambda i: (i, 0)),
        compiler_params=pltpu.CompilerParams(
            dimension_semantics=("parallel",),
            vmem_limit_bytes=int(cap * 0.85)),
    )(*args)
    return out


def _reference(sequence, mask, wk, bk, q, wv, bv):
    """Pure-JAX reproduction of the PyTorch forward."""
    key = jnp.tanh(sequence @ wk + bk)                       # (B, S, Qh)
    att = jnp.squeeze(key @ jnp.reshape(q, (-1, 1)), -1)     # (B, S)
    if mask is not None:
        att = jnp.where(mask != 0, att, -1e30)
    att = jax.nn.softmax(att, axis=-1)
    value = sequence if wv is None else sequence @ wv + bv
    return jnp.sum(value * att[..., None], axis=1)


if __name__ == "__main__":
    B, S, D_in, Qh, Vh = 2, 8, 32, 16, 32

    root = jax.random.PRNGKey(0)
    k_seq, k_wk, k_bk, k_q, k_wv, k_bv, k_big, k_mask = jax.random.split(root, 8)

    sequence = jax.random.normal(k_seq, (B, S, D_in), dtype=jnp.float32)
    wk = jax.random.normal(k_wk, (D_in, Qh), dtype=jnp.float32) * 0.1
    bk = jax.random.normal(k_bk, (1, Qh), dtype=jnp.float32) * 0.1
    q = jax.random.normal(k_q, (Qh, 1), dtype=jnp.float32) * 0.1
    wv = jax.random.normal(k_wv, (D_in, Vh), dtype=jnp.float32) * 0.1
    bv = jax.random.normal(k_bv, (1, Vh), dtype=jnp.float32) * 0.1

    # Unmasked path.
    out = jax.block_until_ready(attention_seq2vec(sequence, None, wk, bk, q, wv, bv))
    ref = _reference(sequence, None, wk, bk, q, wv, bv)
    assert out.shape == (B, Vh)
    assert jnp.allclose(out, ref, atol=3e-5, rtol=3e-5), "unmasked mismatch"

    # All-ones mask must reproduce the unmasked softmax.
    ones_mask = jnp.ones((B, S), dtype=jnp.int32)
    out_m = jax.block_until_ready(attention_seq2vec(sequence, ones_mask, wk, bk, q, wv, bv))
    assert jnp.allclose(out_m, ref, atol=3e-5, rtol=3e-5), "masked path mismatch"

    # value_hidden_size=None path (value == sequence, no identity projection).
    out_id = jax.block_until_ready(attention_seq2vec(sequence, None, wk, bk, q, None, None))
    ref_id = _reference(sequence, None, wk, bk, q, None, None)
    assert out_id.shape == (B, D_in)
    assert jnp.allclose(out_id, ref_id, atol=3e-5, rtol=3e-5), "wv=None mismatch"

    # Larger batch: multi-step grid, partial last block, partial mask, and one
    # fully-masked row (expected to pool to zeros per masked_softmax).
    B_big = 136
    seq_big = jax.random.normal(k_big, (B_big, S, D_in), dtype=jnp.float32)
    mask_big = (jax.random.uniform(k_mask, (B_big, S)) > 0.3).astype(jnp.int32)
    mask_big = mask_big.at[:, 0].set(1)
    mask_big = mask_big.at[5, :].set(0)
    out_big = jax.block_until_ready(
        attention_seq2vec(seq_big, mask_big, wk, bk, q, wv, bv))
    ref_big = _reference(seq_big, mask_big, wk, bk, q, wv, bv)
    ok_rows = jnp.arange(B_big) != 5
    assert out_big.shape == (B_big, Vh)
    assert jnp.allclose(out_big[ok_rows], ref_big[ok_rows], atol=3e-5, rtol=3e-5), \
        "batched masked mismatch"
    assert jnp.allclose(out_big[5], 0.0, atol=1e-6), "fully-masked row not zero"

    # Unmasked large batch (pure parallel / megacore path).
    out_big2 = jax.block_until_ready(
        attention_seq2vec(seq_big, None, wk, bk, q, wv, bv))
    ref_big2 = _reference(seq_big, None, wk, bk, q, wv, bv)
    assert jnp.allclose(out_big2, ref_big2, atol=3e-5, rtol=3e-5), "batched mismatch"

    print("KERNEL_OK")
</pallas_src>

<mosaic_0001>
module attributes {stable_mosaic.version = 11 : i64} {
  func.func @kernel(%arg0: i32, %arg1: memref<2x8x32xf32, #tpu.memory_space<vmem>>, %arg2: memref<32x160xf32, #tpu.memory_space<vmem>>, %arg3: memref<1x160xf32, #tpu.memory_space<vmem>>, %arg4: memref<1x128xf32, #tpu.memory_space<vmem>>, %arg5: memref<2x32xf32, #tpu.memory_space<vmem>>) attributes {dimension_semantics = [#tpu.dimension_semantics<parallel>], iteration_bounds = array<i64: 1>, scalar_prefetch = 0 : i64, scratch_operands = 0 : i64, tpu.core_type = #tpu.core_type<tc>, window_params = [{transform_indices = @transform_0, window_bounds = array<i64: 2, 8, 32>}, {pipeline_mode = #tpu.pipeline_mode<synchronous>, transform_indices = @transform_1, window_bounds = array<i64: 32, 160>}, {pipeline_mode = #tpu.pipeline_mode<synchronous>, transform_indices = @transform_2, window_bounds = array<i64: 1, 160>}, {pipeline_mode = #tpu.pipeline_mode<synchronous>, transform_indices = @transform_3, window_bounds = array<i64: 1, 128>}, {transform_indices = @transform_4, window_bounds = array<i64: 2, 32>}]} {
    %c0 = arith.constant 0 : index
    %c0_0 = arith.constant 0 : index
    %c0_1 = arith.constant 0 : index
    %0 = vector.load %arg1[%c0, %c0_0, %c0_1] : memref<2x8x32xf32, #tpu.memory_space<vmem>>, vector<2x8x32xf32>
    %1 = vector.shape_cast %0 : vector<2x8x32xf32> to vector<16x32xf32>
    %c0_2 = arith.constant 0 : index
    %c0_3 = arith.constant 0 : index
    %2 = vector.load %arg2[%c0_2, %c0_3] : memref<32x160xf32, #tpu.memory_space<vmem>>, vector<32x160xf32>
    %cst = arith.constant dense<0.000000e+00> : vector<16x160xf32>
    %3 = tpu.matmul %1, %2, %cst {dimension_numbers = #tpu.dot_dimension_numbers<[1], [0], [0], [1], [0, 0, 1, 1], [], []>} : vector<16x32xf32>, vector<32x160xf32>, vector<16x160xf32> -> vector<16x160xf32>
    %c0_4 = arith.constant 0 : index
    %c0_5 = arith.constant 0 : index
    %4 = vector.load %arg3[%c0_4, %c0_5] : memref<1x160xf32, #tpu.memory_space<vmem>>, vector<1x160xf32>
    %5 = vector.broadcast %4 : vector<1x160xf32> to vector<16x160xf32>
    %6 = arith.addf %3, %5 : vector<16x160xf32>
    %7 = vector.extract_strided_slice %6 {offsets = [0, 0], sizes = [16, 128], strides = [1, 1]} : vector<16x160xf32> to vector<16x128xf32>
    %8 = math.tanh %7 : vector<16x128xf32>
    %9 = vector.extract_strided_slice %6 {offsets = [0, 128], sizes = [16, 32], strides = [1, 1]} : vector<16x160xf32> to vector<16x32xf32>
    %10 = vector.shape_cast %9 : vector<16x32xf32> to vector<2x8x32xf32>
    %c0_6 = arith.constant 0 : index
    %c0_7 = arith.constant 0 : index
    %11 = vector.load %arg4[%c0_6, %c0_7] : memref<1x128xf32, #tpu.memory_space<vmem>>, vector<1x128xf32>
    %12 = vector.broadcast %11 : vector<1x128xf32> to vector<16x128xf32>
    %13 = arith.mulf %8, %12 : vector<16x128xf32>
    %cst_8 = arith.constant dense<0.000000e+00> : vector<16xf32>
    %14 = vector.multi_reduction <add>, %13, %cst_8 [1] : vector<16x128xf32> to vector<16xf32>
    %15 = vector.shape_cast %14 : vector<16xf32> to vector<16x1xf32>
    %16 = vector.shape_cast %15 : vector<16x1xf32> to vector<2x8x1xf32>
    %cst_9 = arith.constant dense<0xFF800000> : vector<2x1xf32>
    %17 = vector.multi_reduction <maximumf>, %16, %cst_9 [1] : vector<2x8x1xf32> to vector<2x1xf32>
    %18 = vector.shape_cast %17 : vector<2x1xf32> to vector<2x1x1xf32>
    %19 = vector.broadcast %18 : vector<2x1x1xf32> to vector<2x8x1xf32>
    %20 = arith.subf %16, %19 : vector<2x8x1xf32>
    %21 = math.exp %20 : vector<2x8x1xf32>
    %cst_10 = arith.constant dense<0.000000e+00> : vector<2x1xf32>
    %22 = vector.multi_reduction <add>, %21, %cst_10 [1] : vector<2x8x1xf32> to vector<2x1xf32>
    %23 = vector.shape_cast %22 : vector<2x1xf32> to vector<2x1x1xf32>
    %24 = vector.broadcast %21 : vector<2x8x1xf32> to vector<2x8x32xf32>
    %25 = arith.mulf %10, %24 : vector<2x8x32xf32>
    %cst_11 = arith.constant dense<0.000000e+00> : vector<2x32xf32>
    %26 = vector.multi_reduction <add>, %25, %cst_11 [1] : vector<2x8x32xf32> to vector<2x32xf32>
    %27 = vector.shape_cast %26 : vector<2x32xf32> to vector<2x1x32xf32>
    %28 = vector.broadcast %23 : vector<2x1x1xf32> to vector<2x1x32xf32>
    %29 = arith.divf %27, %28 : vector<2x1x32xf32>
    %30 = vector.shape_cast %29 : vector<2x1x32xf32> to vector<2x32xf32>
    %c0_12 = arith.constant 0 : index
    %c0_13 = arith.constant 0 : index
    %31 = vector.load %arg5[%c0_12, %c0_13] : memref<2x32xf32, #tpu.memory_space<vmem>>, vector<2x32xf32>
    tpu.vector_store %arg5[%c0_12, %c0_13], %30 {strides = array<i32>} : memref<2x32xf32, #tpu.memory_space<vmem>>, vector<2x32xf32>,
    return
  }
  func.func @transform_0(%arg0: i32) -> (i32, i32, i32) {
    %c0_i32 = arith.constant 0 : i32
    %c0_i32_0 = arith.constant 0 : i32
    %c0_i32_1 = arith.constant 0 : i32
    return %arg0, %c0_i32, %c0_i32_0 : i32, i32, i32
  }
  func.func @transform_1(%arg0: i32) -> (i32, i32) {
    %c0_i32 = arith.constant 0 : i32
    %c0_i32_0 = arith.constant 0 : i32
    %c0_i32_1 = arith.constant 0 : i32
    return %c0_i32, %c0_i32_0 : i32, i32
  }
  func.func @transform_2(%arg0: i32) -> (i32, i32) {
    %c0_i32 = arith.constant 0 : i32
    %c0_i32_0 = arith.constant 0 : i32
    %c0_i32_1 = arith.constant 0 : i32
    return %c0_i32, %c0_i32_0 : i32, i32
  }
  func.func @transform_3(%arg0: i32) -> (i32, i32) {
    %c0_i32 = arith.constant 0 : i32
    %c0_i32_0 = arith.constant 0 : i32
    %c0_i32_1 = arith.constant 0 : i32
    return %c0_i32, %c0_i32_0 : i32, i32
  }
  func.func @transform_4(%arg0: i32) -> (i32, i32) {
    %c0_i32 = arith.constant 0 : i32
    %c0_i32_0 = arith.constant 0 : i32
    return %arg0, %c0_i32 : i32, i32
  }
}

</mosaic_0001>

<llo_original>
// kernel: tpu_custom_call.1
$region0: #{tpu_custom_call.1}
  #allocation0 [shape = 'u32[]', space=smem, size = 0x4, offset = 0x4, fixed_abs, tag = 'smem constant byte address 0x4 - core index']
  #allocation1 [shape = 'u32[144,128]{1,0:T(1,128)}', space=vmem, size = 0x12000, scoped, tag = 'internal scratch']
  %s0 = inlined_call_operand.hbm [shape: f32[2,8,32], index: 0, kind: input, shape index: {}]
  %s1 = inlined_call_operand.hbm [shape: f32[32,160], index: 1, kind: input, shape index: {}]
  %s2 = inlined_call_operand.vmem [shape: f32[1,160], index: 2, kind: input, shape index: {}]
  %s3 = inlined_call_operand.vmem [shape: f32[1,128], index: 3, kind: input, shape index: {}]
  %s4 = inlined_call_operand.hbm [shape: f32[2,32], index: 4, kind: output, shape index: {}]
  %s5 = sld [smem:[#allocation0]]
  $region34: #{tpu_custom_call.1} parent=0
    _
  %s7 = ssub.s32 1, %s5
  %s8 = scalar_select 0, %s7, %s5
  $region1: #{tpu_custom_call.1} parent=0
    #allocation2 [shape = 'u8[8192]{0}', space=vmem, size = 0x2000, scoped, tag = 'input window, operand 0, single buffered']
    #allocation3 [shape = 's32[1]{0}', space=sflag, size = 0x4, scoped, tag = 'scoped memory for tpu_custom_call.1']
    #allocation4 [shape = 's32[1]{0}', space=sflag, size = 0x4, scoped, tag = 'scoped memory for tpu_custom_call.1']
    #allocation5 [shape = 'u8[32768]{0}', space=vmem, size = 0x8000, scoped, tag = 'input window, operand 1, single buffered']
    #allocation6 [shape = 's32[1]{0}', space=sflag, size = 0x4, scoped, tag = 'scoped memory for tpu_custom_call.1']
    #allocation7 [shape = 'u8[1024]{0}', space=vmem, size = 0x400, scoped, tag = 'output window, operand 0, single buffered']
    %9 = vsyncpa [#allocation3], 0
    %10 = vsyncpa [#allocation6], 0
    %11 = vsyncpa [#allocation4], 0
    // Predicated region
    $region2: #{tpu_custom_call.1} parent=1 // pred_check
      _
    $region3: #{tpu_custom_call.1} parent=1 // pred_check_branch
      %13 = sbr.rel (0) target = $region5
    $region4: #{tpu_custom_call.1} parent=1 // pred_region
      %s15 = ssub.s32 256, 256
      %16 = vsyncadd [#allocation3], %s15
      %s17 = sshll.u32 [#allocation2], 4
      %s18 = int_to_ptr.vmem [resolvable:$true] %s17
      %23 = dma.hbm_to_vmem [thread:$0]  %s0, 256, %s18, [#allocation3], 128, 128, 8
    $region5: #{tpu_custom_call.1} parent=1 // pred_fallthru
      _
    // Predicated region
    $region6: #{tpu_custom_call.1} parent=1 // pred_check
      _
    $region7: #{tpu_custom_call.1} parent=1 // pred_check_branch
      %25 = sbr.rel (0) target = $region9
    $region8: #{tpu_custom_call.1} parent=1 // pred_region
      %s27 = ssub.s32 1024, 1024
      %28 = vsyncadd [#allocation6], %s27
      %s29 = sshll.u32 [#allocation5], 4
      %s30 = int_to_ptr.vmem [resolvable:$true] %s29
      %35 = dma.hbm_to_vmem [thread:$0]  %s1, 1024, %s30, [#allocation6], 256, 256, 16
    $region9: #{tpu_custom_call.1} parent=1 // pred_fallthru
      _
    // Predicated region
    $region10: #{tpu_custom_call.1} parent=1 // pred_check
      _
    $region11: #{tpu_custom_call.1} parent=1 // pred_check_branch
      %37 = sbr.rel (0) target = $region13
    $region12: #{tpu_custom_call.1} parent=1 // pred_region
      _
    $region13: #{tpu_custom_call.1} parent=1 // pred_fallthru
      _
    // Predicated region
    $region14: #{tpu_custom_call.1} parent=1 // pred_check
      _
    $region15: #{tpu_custom_call.1} parent=1 // pred_check_branch
      %39 = sbr.rel (0) target = $region17
    $region16: #{tpu_custom_call.1} parent=1 // pred_region
      _
    $region17: #{tpu_custom_call.1} parent=1 // pred_fallthru
      _
    // Predicated region
    $region18: #{tpu_custom_call.1} parent=1 // pred_check
      _
    $region19: #{tpu_custom_call.1} parent=1 // pred_check_branch
      %41 = sbr.rel (0) target = $region21
    $region20: #{tpu_custom_call.1} parent=1 // pred_region
      %42 = dma.done [#allocation3], 256
    $region21: #{tpu_custom_call.1} parent=1 // pred_fallthru
      _
    // Predicated region
    $region22: #{tpu_custom_call.1} parent=1 // pred_check
      _
    $region23: #{tpu_custom_call.1} parent=1 // pred_check_branch
      %44 = sbr.rel (0) target = $region25
    $region24: #{tpu_custom_call.1} parent=1 // pred_region
      %45 = dma.done [#allocation6], 1024
    $region25: #{tpu_custom_call.1} parent=1 // pred_fallthru
      _
    %v46 = vld [vmem:[#allocation2] sm:$0xff]
    %v47 = vld [vmem:[#allocation2 + $0x8] sm:$0xff]
    %v48 = vld [vmem:[#allocation5] sm:$0xff]
    %v49 = vld [vmem:[#allocation5 + $0x8] sm:$0xff]
    %v50 = vld [vmem:[#allocation5 + $0x10] sm:$0xff]
    %v51 = vld [vmem:[#allocation5 + $0x18] sm:$0xff]
    %v52 = vld [vmem:[#allocation5 + $0x20] sm:$0xff]
    %v53 = vld [vmem:[#allocation5 + $0x28] sm:$0xff]
    %v54 = vld [vmem:[#allocation5 + $0x30] sm:$0xff]
    %v55 = vld [vmem:[#allocation5 + $0x38] sm:$0xff]
    %v56 = vld [vmem:[%s2] sm:$0x3]
    %v58 = vlaneseq
    %v59 = vshrl.u32 %v58, 7
    %v60 = vsub.s32 0, %v59
    %v61 = vrot.slane %v56, %v60
    %v62 = vlaneseq
    %v63 = vshrl.u32 %v62, 7
    %v64 = vsub.s32 1, %v63
    %v65 = vrot.slane %v56, %v64
    %vm68 = vcmask 261120
    %v70 = vsel %vm68, %v46, 0
    %v73 = vsel %vm68, %v47, 0
    %75 = vmatprep.subr.mxu0 %v49
    %76 = vmatpush1.msra.mxu0 %v48
    %77 = vmatprep.subr.mxu0 %v51
    %78 = vmatpush1.msra.mxu0 %v50
    %79 = vmatprep.subr.mxu0 %v53
    %80 = vmatpush1.msra.mxu0 %v52
    %81 = vmatprep.subr.mxu0 %v55
    %82 = vmatpush1.msra.mxu0 %v54
    %83 = vmatprep.subr.mxu0 0.0
    %84 = vmatpush1.msra.mxu0 0.0
    %85 = vmatprep.subr.mxu0 0.0
    %86 = vmatpush1.msra.mxu0 0.0
    %87 = vmatprep.subr.mxu0 0.0
    %88 = vmatpush1.msra.mxu0 0.0
    %89 = vmatprep.subr.mxu0 0.0
    %90 = vmatpush1.msra.mxu0 0.0
    %91 = vmatprep.subr.mxu0 0.0
    %92 = vmatpush1.msra.mxu0 0.0
    %93 = vmatprep.subr.mxu0 0.0
    %94 = vmatpush1.msra.mxu0 0.0
    %95 = vmatprep.subr.mxu0 0.0
    %96 = vmatpush1.msra.mxu0 0.0
    %97 = vmatprep.subr.mxu0 0.0
    %98 = vmatpush1.msra.mxu0 0.0
    %99 = vmatprep.subr.mxu0 0.0
    %100 = vmatpush1.msra.mxu0 0.0
    %101 = vmatprep.subr.mxu0 0.0
    %102 = vmatpush1.msra.mxu0 0.0
    %103 = vmatprep.subr.mxu0 0.0
    %104 = vmatpush1.msra.mxu0 0.0
    %105 = vmatprep.subr.mxu0 0.0
    %106 = vmatpush1.msra.mxu0 0.0
    %107 = vmatprep.subr.mxu0 0.0
    %108 = vmatpush1.msra.mxu0 0.0
    %109 = vmatprep.subr.mxu0 0.0
    %110 = vmatpush1.msra.mxu0 0.0
    %111 = vmatprep.subr.mxu0 0.0
    %112 = vmatpush1.msra.mxu0 0.0
    %113 = vmatprep.subr.mxu0 0.0
    %114 = vmatpush1.msra.mxu0 0.0
    %115 = vmatprep.subr.mxu0 0.0
    %116 = vmatpush1.msra.mxu0 0.0
    %117 = vmatprep.subr.mxu0 0.0
    %118 = vmatpush1.msra.mxu0 0.0
    %119 = vmatprep.subr.mxu0 0.0
    %120 = vmatpush1.msra.mxu0 0.0
    %121 = vmatprep.subr.mxu0 0.0
    %122 = vmatpush1.msra.mxu0 0.0
    %123 = vmatprep.subr.mxu0 0.0
    %124 = vmatpush1.msra.mxu0 0.0
    %125 = vmatprep.subr.mxu0 0.0
    %126 = vmatpush1.msra.mxu0 0.0
    %127 = vmatprep.subr.mxu0 0.0
    %128 = vmatpush1.msra.mxu0 0.0
    %129 = vmatprep.subr.mxu0 0.0
    %130 = vmatpush1.msra.mxu0 0.0
    %131 = vmatprep.subr.mxu0 0.0
    %132 = vmatpush1.msra.mxu0 0.0
    %133 = vmatprep.subr.mxu0 0.0
    %134 = vmatpush1.msra.mxu0 0.0
    %135 = vmatprep.subr.mxu0 0.0
    %136 = vmatpush1.msra.mxu0 0.0
    %137 = vmatprep.subr.mxu0 0.0
    %138 = vmatpush1.msra.mxu0 0.0
    %139 = vmatprep.mubr.f32.mxu0 0.0
    %140 = vmatmul.mubr.f32.gmra.mrb[0].mxu0 %v70
    %v141 = vpop.f32.mrb[0].mxu0
    %v142 = vadd.f32 %v61, %v141
    %v143 = vpop.f32.mrb[0].mxu0
    %v144 = vadd.f32 %v65, %v143
    %145 = vmatprep.mubr.f32.mxu0 0.0
    %146 = vmatmul.mubr.f32.gmra.mrb[0].mxu0 %v73
    %v147 = vpop.f32.mrb[0].mxu0
    %v148 = vadd.f32 %v61, %v147
    %v149 = vpop.f32.mrb[0].mxu0
    %v150 = vadd.f32 %v65, %v149
    %151 = vdwg.mxu0
    %v152 = vtanh.pop %v142
    %v153 = vtanh.pop %v148
    %v154 = vld [vmem:[%s3] sm:$0x1]
    %v156 = vlaneseq
    %v157 = vshrl.u32 %v156, 7
    %v158 = vsub.s32 0, %v157
    %v159 = vrot.slane %v154, %v158
    %v161 = vmul.f32 %v152, %v159
    %v162 = vmul.f32 %v153, %v159
    %163 = vadd.xlane.f32.xlu0 %v161
    %v164 = vpop.xlane.xlu0 %163
    %165 = vadd.xlane.f32.xlu0 %v162
    %v166 = vpop.xlane.xlu0 %165
    %v167 = vrot.slane %v164, 4
    %v168 = vmax.f32 %v164, %v167
    %v169 = vrot.slane %v168, 2
    %v170 = vmax.f32 %v168, %v169
    %v171 = vrot.slane %v170, 1
    %v172 = vmax.f32 %v170, %v171
    %v173 = vrot.slane %v166, 4
    %v174 = vmax.f32 %v166, %v173
    %v175 = vrot.slane %v174, 2
    %v176 = vmax.f32 %v174, %v175
    %v177 = vrot.slane %v176, 1
    %v178 = vmax.f32 %v176, %v177
    %v179 = vsub.f32 %v164, %v172
    %v180 = vsub.f32 %v166, %v178
    %v181 = vmul.f32 %v179, 1.442695
    %v182 = vpow.pop %v181
    %v183 = vmul.f32 %v180, 1.442695
    %v184 = vpow.pop %v183
    %v185 = vrot.slane %v182, 4
    %v186 = vadd.f32 %v182, %v185
    %v187 = vrot.slane %v186, 2
    %v188 = vadd.f32 %v186, %v187
    %v189 = vrot.slane %v188, 1
    %v190 = vadd.f32 %v188, %v189
    %v191 = vrot.slane %v184, 4
    %v192 = vadd.f32 %v184, %v191
    %v193 = vrot.slane %v192, 2
    %v194 = vadd.f32 %v192, %v193
    %v195 = vrot.slane %v194, 1
    %v196 = vadd.f32 %v194, %v195
    %v197 = vmul.f32 %v144, %v182
    %v198 = vmul.f32 %v150, %v184
    %v199 = vsel %vm68, %v197, 0.0
    %v200 = vrot.slane %v199, 4
    %v201 = vadd.f32 %v199, %v200
    %v202 = vrot.slane %v201, 2
    %v203 = vadd.f32 %v201, %v202
    %v204 = vrot.slane %v203, 1
    %v205 = vadd.f32 %v203, %v204
    %v206 = vsel %vm68, %v198, 0.0
    %v207 = vrot.slane %v206, 4
    %v208 = vadd.f32 %v206, %v207
    %v209 = vrot.slane %v208, 2
    %v210 = vadd.f32 %v208, %v209
    %v211 = vrot.slane %v210, 1
    %v212 = vadd.f32 %v210, %v211
    %v213 = vrcp.pop %v190
    %v214 = vmul.f32 %v205, %v213
    %v215 = vrcp.pop %v196
    %v216 = vmul.f32 %v212, %v215
    %vm219 = vcmask 1041409
    %v220 = vsel %vm219, %v216, %v214
    %vm222 = vcmask 254976
    %223 = vst.msk [vmem:[#allocation7] sm:$0x3] %vm222, %v220
    // Predicated region
    $region26: #{tpu_custom_call.1} parent=1 // pred_check
      _
    $region27: #{tpu_custom_call.1} parent=1 // pred_check_branch
      %225 = sbr.rel (0) target = $region29
    $region28: #{tpu_custom_call.1} parent=1 // pred_region
      %s227 = ssub.s32 32, 32
      %228 = vsyncadd [#allocation4], %s227
      %s230 = sshll.u32 [#allocation7], 4
      %s231 = int_to_ptr.vmem [resolvable:$true] %s230
      %233 = dma.vmem_to_hbm [thread:$0]  %s231, 32, %s4, [#allocation4]
    $region29: #{tpu_custom_call.1} parent=1 // pred_fallthru
      _
    // Predicated region
    $region30: #{tpu_custom_call.1} parent=1 // pred_check
      _
    $region31: #{tpu_custom_call.1} parent=1 // pred_check_branch
      %235 = sbr.rel (0) target = $region33
    $region32: #{tpu_custom_call.1} parent=1 // pred_region
      %236 = dma.done [#allocation4], 32
    $region33: #{tpu_custom_call.1} parent=1 // pred_fallthru
      _
    %237 = vsyncpa [#allocation3], 1
    %238 = vsyncpa [#allocation6], 1
    %239 = vsyncpa [#allocation4], 1

</llo_original>
